<compile_context>
chip_gen: v5e
topology: v5e:2x2
jax: 0.10.0
libtpu: 0.0.40
codegen_flags: <defaults>
</compile_context>

<pallas_src>
import functools

import jax
import jax.numpy as jnp
from jax.experimental import pallas as pl
from jax.experimental.pallas import tpu as pltpu

LN_EPS = 1e-5  # nn.LayerNorm default


def _round_up(x, m):
    return ((x + m - 1) // m) * m


def critic_kernel(s_ref, w1_ref, w2_ref, wq_ref, p_ref, out_ref, *,
                  hidden, out_pad, mxu_dtype):
    """Fused MLP + merged Q heads.

    p_ref rows (packed small params, f32):
      0: b1   1: g1   2: be1   3: b2   4: g2   5: be2   6: bq (lane-padded)
    """
    H = hidden
    inv_h = 1.0 / float(H)

    def ln_relu(h, g, b):
        # Single-pass LayerNorm (biased variance, like nn.LayerNorm), f32.
        mu = jnp.sum(h, axis=-1, keepdims=True) * inv_h
        ex2 = jnp.sum(h * h, axis=-1, keepdims=True) * inv_h
        var = jnp.maximum(ex2 - mu * mu, 0.0)
        h = (h - mu) * jax.lax.rsqrt(var + LN_EPS) * g + b
        return jnp.maximum(h, 0.0)

    # Layer 1: Linear -> LayerNorm -> ReLU
    x = s_ref[...].astype(mxu_dtype)
    h = jnp.dot(x, w1_ref[...], preferred_element_type=jnp.float32) + p_ref[0:1, :H]
    h = ln_relu(h, p_ref[1:2, :H], p_ref[2:3, :H])

    # Layer 2: Linear -> LayerNorm -> ReLU
    h = jnp.dot(h.astype(mxu_dtype), w2_ref[...],
                preferred_element_type=jnp.float32) + p_ref[3:4, :H]
    h = ln_relu(h, p_ref[4:5, :H], p_ref[5:6, :H])

    # Merged Q heads: single MXU pass, single lane-dense (TB, out_pad) store.
    out_ref[...] = (
        jnp.dot(h.astype(mxu_dtype), wq_ref[...],
                preferred_element_type=jnp.float32)
        + p_ref[6:7, :out_pad]
    )


def prepare_critic_params(params, matmul_dtype=jnp.bfloat16):
    """One-time param prep (head merge, lane padding, small-vector packing,
    bf16 weight cast).  Call once per set of params and reuse the result."""
    S, H = params["w1"].shape
    A = params["wq1"].shape[1]

    # Lane-dense merged head output width (>= 128 so stores are unmasked).
    OUT_PAD = max(_round_up(2 * A, 128), 128)
    PW = max(H, OUT_PAD)  # packed-params lane width

    # Merge + pad the two Q heads.
    wq = jnp.concatenate([params["wq1"], params["wq2"]], axis=1)          # (H, 2A)
    wq_pad = jnp.zeros((H, OUT_PAD), jnp.float32).at[:, : 2 * A].set(wq)
    bq = jnp.concatenate([params["bq1"], params["bq2"]])                  # (2A,)
    bq_pad = jnp.zeros((OUT_PAD,), jnp.float32).at[: 2 * A].set(bq)

    # Pack all small per-layer vectors into one array -> single DMA.
    packed = jnp.zeros((8, PW), jnp.float32)
    for r, v in enumerate(
        (params["b1"], params["g1"], params["be1"],
         params["b2"], params["g2"], params["be2"])
    ):
        packed = packed.at[r, :H].set(v)
    packed = packed.at[6, :OUT_PAD].set(bq_pad)

    prepped = dict(
        w1=params["w1"].astype(matmul_dtype),
        w2=params["w2"].astype(matmul_dtype),
        wq=wq_pad.astype(matmul_dtype),
        packed=packed,
        state_dim=S, hidden=H, action_dim=A,
        out_pad=OUT_PAD, pw=PW, matmul_dtype=matmul_dtype,
    )
    # Materialize now so the padding/packing ops never run in the hot loop.
    arrays = jax.block_until_ready(
        (prepped["w1"], prepped["w2"], prepped["wq"], prepped["packed"]))
    prepped["w1"], prepped["w2"], prepped["wq"], prepped["packed"] = arrays
    return prepped


def critic_forward(state, prepped, *, tb_max=512):
    """state: (B, state_dim) f32.  Returns (q1, q2), each (B, action_dim) f32."""
    B, S = state.shape
    assert S == prepped["state_dim"]
    H, A = prepped["hidden"], prepped["action_dim"]
    OUT_PAD, PW = prepped["out_pad"], prepped["pw"]

    # Batch tiling: aim for >= 2 grid steps (v7x megacore) with 8-row-aligned
    # tiles, capped at tb_max so double-buffered state/out tiles stay small.
    TB = min(tb_max, max(8, _round_up((B + 1) // 2, 8)))
    B_pad = _round_up(B, TB)
    if B_pad != B:
        state = jnp.pad(state, ((0, B_pad - B), (0, 0)))  # pad remainder rows only

    kernel = functools.partial(critic_kernel, hidden=H, out_pad=OUT_PAD,
                               mxu_dtype=prepped["matmul_dtype"])

    def make_specs(single_buffer_weights):
        kw = {}
        if single_buffer_weights and hasattr(pl, "Buffered"):
            # Constant-index blocks: fetched once, no need to double-buffer.
            kw = dict(pipeline_mode=pl.Buffered(1))
        return [
            pl.BlockSpec((TB, S), lambda i: (i, 0)),              # state tile
            pl.BlockSpec((S, H), lambda i: (0, 0), **kw),         # w1 (resident)
            pl.BlockSpec((H, H), lambda i: (0, 0), **kw),         # w2 (resident)
            pl.BlockSpec((H, OUT_PAD), lambda i: (0, 0), **kw),   # merged heads
            pl.BlockSpec((8, PW), lambda i: (0, 0), **kw),        # packed vectors
        ]

    def run(single_buffer_weights):
        return pl.pallas_call(
            kernel,
            grid=(B_pad // TB,),
            in_specs=make_specs(single_buffer_weights),
            out_specs=pl.BlockSpec((TB, OUT_PAD), lambda i: (i, 0)),
            out_shape=jax.ShapeDtypeStruct((B_pad, OUT_PAD), jnp.float32),
            compiler_params=pltpu.CompilerParams(dimension_semantics=("parallel",)),
        )(state, prepped["w1"], prepped["w2"], prepped["wq"], prepped["packed"])

    try:
        out = run(True)
    except Exception:
        # Fallback if this jax/Mosaic build rejects pipeline_mode=Buffered(1).
        out = run(False)

    return out[:B, :A], out[:B, A: 2 * A]


def init_params(key, state_dim, action_dim, hidden_size):
    """Deterministic synthetic init.  Linear weights stored pre-transposed (in, out)."""
    ks = jax.random.split(key, 8)

    def lin(kw, kb, fan_in, fan_out):
        bound = 1.0 / jnp.sqrt(fan_in)
        w = jax.random.uniform(kw, (fan_in, fan_out), jnp.float32, -bound, bound)
        b = jax.random.uniform(kb, (fan_out,), jnp.float32, -bound, bound)
        return w, b

    w1, b1 = lin(ks[0], ks[1], state_dim, hidden_size)
    w2, b2 = lin(ks[2], ks[3], hidden_size, hidden_size)
    wq1, bq1 = lin(ks[4], ks[5], hidden_size, action_dim)
    wq2, bq2 = lin(ks[6], ks[7], hidden_size, action_dim)

    return dict(
        w1=w1, b1=b1,
        g1=jnp.ones((hidden_size,), jnp.float32),
        be1=jnp.zeros((hidden_size,), jnp.float32),
        w2=w2, b2=b2,
        g2=jnp.ones((hidden_size,), jnp.float32),
        be2=jnp.zeros((hidden_size,), jnp.float32),
        wq1=wq1, bq1=bq1,
        wq2=wq2, bq2=bq2,
    )


def critic_reference(state, params, matmul_dtype=jnp.float32):
    """Pure-JAX reference of the same forward pass.  With matmul_dtype=bf16 it
    mirrors the kernel's MXU dtype so the numerics are directly comparable."""
    def ln(h, g, b):
        mu = jnp.mean(h, axis=-1, keepdims=True)
        var = jnp.mean((h - mu) ** 2, axis=-1, keepdims=True)
        return (h - mu) / jnp.sqrt(var + LN_EPS) * g + b

    def mm(x, w):
        return jnp.dot(x.astype(matmul_dtype), w.astype(matmul_dtype),
                       preferred_element_type=jnp.float32)

    h = jnp.maximum(ln(mm(state, params["w1"]) + params["b1"],
                       params["g1"], params["be1"]), 0.0)
    h = jnp.maximum(ln(mm(h, params["w2"]) + params["b2"],
                       params["g2"], params["be2"]), 0.0)
    return (mm(h, params["wq1"]) + params["bq1"],
            mm(h, params["wq2"]) + params["bq2"])


if __name__ == "__main__":
    B, state_dim, action_dim, hidden = 16, 16, 4, 32

    key = jax.random.PRNGKey(0)
    k_state, k_params = jax.random.split(key)
    state = jax.random.normal(k_state, (B, state_dim), jnp.float32)
    params = init_params(k_params, state_dim, action_dim, hidden)

    prepped = prepare_critic_params(params)          # one-time prep (bf16 weights)
    q1, q2 = critic_forward(state, prepped)
    q1 = jax.block_until_ready(q1)
    q2 = jax.block_until_ready(q2)

    # Compare against a reference that uses the same bf16 MXU dtype.
    r1, r2 = critic_reference(state, params, matmul_dtype=jnp.bfloat16)
    assert jnp.allclose(q1, r1, atol=2e-3, rtol=2e-3), "q1 mismatch"
    assert jnp.allclose(q2, r2, atol=2e-3, rtol=2e-3), "q2 mismatch"

    print("KERNEL_OK")
</pallas_src>

<mosaic_0001>
module attributes {stable_mosaic.version = 11 : i64} {
  func.func @critic_kernel(%arg0: i32, %arg1: memref<8x16xf32, #tpu.memory_space<vmem>>, %arg2: memref<16x32xbf16, #tpu.memory_space<vmem>>, %arg3: memref<32x32xbf16, #tpu.memory_space<vmem>>, %arg4: memref<32x128xbf16, #tpu.memory_space<vmem>>, %arg5: memref<8x128xf32, #tpu.memory_space<vmem>>, %arg6: memref<8x128xf32, #tpu.memory_space<vmem>>) attributes {dimension_semantics = [#tpu.dimension_semantics<parallel>], iteration_bounds = array<i64: 2>, scalar_prefetch = 0 : i64, scratch_operands = 0 : i64, tpu.core_type = #tpu.core_type<tc>, window_params = [{transform_indices = @transform_0, window_bounds = array<i64: 8, 16>}, {pipeline_mode = #tpu.pipeline_mode<synchronous>, transform_indices = @transform_1, window_bounds = array<i64: 16, 32>}, {pipeline_mode = #tpu.pipeline_mode<synchronous>, transform_indices = @transform_2, window_bounds = array<i64: 32, 32>}, {pipeline_mode = #tpu.pipeline_mode<synchronous>, transform_indices = @transform_3, window_bounds = array<i64: 32, 128>}, {pipeline_mode = #tpu.pipeline_mode<synchronous>, transform_indices = @transform_4, window_bounds = array<i64: 8, 128>}, {transform_indices = @transform_5, window_bounds = array<i64: 8, 128>}]} {
    %c0 = arith.constant 0 : index
    %c0_0 = arith.constant 0 : index
    %0 = vector.load %arg1[%c0, %c0_0] : memref<8x16xf32, #tpu.memory_space<vmem>>, vector<8x16xf32>
    %1 = arith.truncf %0 : vector<8x16xf32> to vector<8x16xbf16>
    %c0_1 = arith.constant 0 : index
    %c0_2 = arith.constant 0 : index
    %2 = vector.load %arg2[%c0_1, %c0_2] : memref<16x32xbf16, #tpu.memory_space<vmem>>, vector<16x32xbf16>
    %cst = arith.constant dense<0.000000e+00> : vector<8x32xf32>
    %3 = tpu.matmul %1, %2, %cst {dimension_numbers = #tpu.dot_dimension_numbers<[1], [0], [0], [1], [0, 0, 1, 1], [], []>} : vector<8x16xbf16>, vector<16x32xbf16>, vector<8x32xf32> -> vector<8x32xf32>
    %c0_3 = arith.constant 0 : index
    %c0_4 = arith.constant 0 : index
    %4 = vector.load %arg5[%c0_3, %c0_4] : memref<8x128xf32, #tpu.memory_space<vmem>>, vector<1x32xf32>
    %5 = vector.broadcast %4 : vector<1x32xf32> to vector<8x32xf32>
    %6 = arith.addf %3, %5 : vector<8x32xf32>
    %c1 = arith.constant 1 : index
    %c0_5 = arith.constant 0 : index
    %7 = vector.load %arg5[%c1, %c0_5] : memref<8x128xf32, #tpu.memory_space<vmem>>, vector<1x32xf32>
    %c2 = arith.constant 2 : index
    %c0_6 = arith.constant 0 : index
    %8 = vector.load %arg5[%c2, %c0_6] : memref<8x128xf32, #tpu.memory_space<vmem>>, vector<1x32xf32>
    %cst_7 = arith.constant dense<0.000000e+00> : vector<8xf32>
    %9 = vector.multi_reduction <add>, %6, %cst_7 [1] : vector<8x32xf32> to vector<8xf32>
    %10 = vector.shape_cast %9 : vector<8xf32> to vector<8x1xf32>
    %cst_8 = arith.constant 3.125000e-02 : f32
    %11 = vector.broadcast %cst_8 : f32 to vector<8x1xf32>
    %12 = arith.mulf %10, %11 : vector<8x1xf32>
    %13 = arith.mulf %6, %6 : vector<8x32xf32>
    %cst_9 = arith.constant dense<0.000000e+00> : vector<8xf32>
    %14 = vector.multi_reduction <add>, %13, %cst_9 [1] : vector<8x32xf32> to vector<8xf32>
    %15 = vector.shape_cast %14 : vector<8xf32> to vector<8x1xf32>
    %cst_10 = arith.constant 3.125000e-02 : f32
    %16 = vector.broadcast %cst_10 : f32 to vector<8x1xf32>
    %17 = arith.mulf %15, %16 : vector<8x1xf32>
    %18 = arith.mulf %12, %12 : vector<8x1xf32>
    %19 = arith.subf %17, %18 : vector<8x1xf32>
    %cst_11 = arith.constant 0.000000e+00 : f32
    %20 = vector.broadcast %cst_11 : f32 to vector<8x1xf32>
    %21 = arith.maximumf %19, %20 : vector<8x1xf32>
    %22 = vector.broadcast %12 : vector<8x1xf32> to vector<8x32xf32>
    %23 = arith.subf %6, %22 : vector<8x32xf32>
    %cst_12 = arith.constant 9.99999974E-6 : f32
    %24 = vector.broadcast %cst_12 : f32 to vector<8x1xf32>
    %25 = arith.addf %21, %24 : vector<8x1xf32>
    %26 = math.rsqrt %25 : vector<8x1xf32>
    %27 = vector.broadcast %26 : vector<8x1xf32> to vector<8x32xf32>
    %28 = arith.mulf %23, %27 : vector<8x32xf32>
    %29 = vector.broadcast %7 : vector<1x32xf32> to vector<8x32xf32>
    %30 = arith.mulf %28, %29 : vector<8x32xf32>
    %31 = vector.broadcast %8 : vector<1x32xf32> to vector<8x32xf32>
    %32 = arith.addf %30, %31 : vector<8x32xf32>
    %cst_13 = arith.constant 0.000000e+00 : f32
    %33 = vector.broadcast %cst_13 : f32 to vector<8x32xf32>
    %34 = arith.maximumf %32, %33 : vector<8x32xf32>
    %35 = arith.truncf %34 : vector<8x32xf32> to vector<8x32xbf16>
    %c0_14 = arith.constant 0 : index
    %c0_15 = arith.constant 0 : index
    %36 = vector.load %arg3[%c0_14, %c0_15] : memref<32x32xbf16, #tpu.memory_space<vmem>>, vector<32x32xbf16>
    %cst_16 = arith.constant dense<0.000000e+00> : vector<8x32xf32>
    %37 = tpu.matmul %35, %36, %cst_16 {dimension_numbers = #tpu.dot_dimension_numbers<[1], [0], [0], [1], [0, 0, 1, 1], [], []>} : vector<8x32xbf16>, vector<32x32xbf16>, vector<8x32xf32> -> vector<8x32xf32>
    %c3 = arith.constant 3 : index
    %c0_17 = arith.constant 0 : index
    %38 = vector.load %arg5[%c3, %c0_17] : memref<8x128xf32, #tpu.memory_space<vmem>>, vector<1x32xf32>
    %39 = vector.broadcast %38 : vector<1x32xf32> to vector<8x32xf32>
    %40 = arith.addf %37, %39 : vector<8x32xf32>
    %c4 = arith.constant 4 : index
    %c0_18 = arith.constant 0 : index
    %41 = vector.load %arg5[%c4, %c0_18] : memref<8x128xf32, #tpu.memory_space<vmem>>, vector<1x32xf32>
    %c5 = arith.constant 5 : index
    %c0_19 = arith.constant 0 : index
    %42 = vector.load %arg5[%c5, %c0_19] : memref<8x128xf32, #tpu.memory_space<vmem>>, vector<1x32xf32>
    %cst_20 = arith.constant dense<0.000000e+00> : vector<8xf32>
    %43 = vector.multi_reduction <add>, %40, %cst_20 [1] : vector<8x32xf32> to vector<8xf32>
    %44 = vector.shape_cast %43 : vector<8xf32> to vector<8x1xf32>
    %cst_21 = arith.constant 3.125000e-02 : f32
    %45 = vector.broadcast %cst_21 : f32 to vector<8x1xf32>
    %46 = arith.mulf %44, %45 : vector<8x1xf32>
    %47 = arith.mulf %40, %40 : vector<8x32xf32>
    %cst_22 = arith.constant dense<0.000000e+00> : vector<8xf32>
    %48 = vector.multi_reduction <add>, %47, %cst_22 [1] : vector<8x32xf32> to vector<8xf32>
    %49 = vector.shape_cast %48 : vector<8xf32> to vector<8x1xf32>
    %cst_23 = arith.constant 3.125000e-02 : f32
    %50 = vector.broadcast %cst_23 : f32 to vector<8x1xf32>
    %51 = arith.mulf %49, %50 : vector<8x1xf32>
    %52 = arith.mulf %46, %46 : vector<8x1xf32>
    %53 = arith.subf %51, %52 : vector<8x1xf32>
    %cst_24 = arith.constant 0.000000e+00 : f32
    %54 = vector.broadcast %cst_24 : f32 to vector<8x1xf32>
    %55 = arith.maximumf %53, %54 : vector<8x1xf32>
    %56 = vector.broadcast %46 : vector<8x1xf32> to vector<8x32xf32>
    %57 = arith.subf %40, %56 : vector<8x32xf32>
    %cst_25 = arith.constant 9.99999974E-6 : f32
    %58 = vector.broadcast %cst_25 : f32 to vector<8x1xf32>
    %59 = arith.addf %55, %58 : vector<8x1xf32>
    %60 = math.rsqrt %59 : vector<8x1xf32>
    %61 = vector.broadcast %60 : vector<8x1xf32> to vector<8x32xf32>
    %62 = arith.mulf %57, %61 : vector<8x32xf32>
    %63 = vector.broadcast %41 : vector<1x32xf32> to vector<8x32xf32>
    %64 = arith.mulf %62, %63 : vector<8x32xf32>
    %65 = vector.broadcast %42 : vector<1x32xf32> to vector<8x32xf32>
    %66 = arith.addf %64, %65 : vector<8x32xf32>
    %cst_26 = arith.constant 0.000000e+00 : f32
    %67 = vector.broadcast %cst_26 : f32 to vector<8x32xf32>
    %68 = arith.maximumf %66, %67 : vector<8x32xf32>
    %69 = arith.truncf %68 : vector<8x32xf32> to vector<8x32xbf16>
    %c0_27 = arith.constant 0 : index
    %c0_28 = arith.constant 0 : index
    %70 = vector.load %arg4[%c0_27, %c0_28] : memref<32x128xbf16, #tpu.memory_space<vmem>>, vector<32x128xbf16>
    %cst_29 = arith.constant dense<0.000000e+00> : vector<8x128xf32>
    %71 = tpu.matmul %69, %70, %cst_29 {dimension_numbers = #tpu.dot_dimension_numbers<[1], [0], [0], [1], [0, 0, 1, 1], [], []>} : vector<8x32xbf16>, vector<32x128xbf16>, vector<8x128xf32> -> vector<8x128xf32>
    %c6 = arith.constant 6 : index
    %c0_30 = arith.constant 0 : index
    %72 = vector.load %arg5[%c6, %c0_30] : memref<8x128xf32, #tpu.memory_space<vmem>>, vector<1x128xf32>
    %73 = vector.broadcast %72 : vector<1x128xf32> to vector<8x128xf32>
    %74 = arith.addf %71, %73 : vector<8x128xf32>
    %c0_31 = arith.constant 0 : index
    %c0_32 = arith.constant 0 : index
    %75 = vector.load %arg6[%c0_31, %c0_32] : memref<8x128xf32, #tpu.memory_space<vmem>>, vector<8x128xf32>
    tpu.vector_store %arg6[%c0_31, %c0_32], %74 {strides = array<i32>} : memref<8x128xf32, #tpu.memory_space<vmem>>, vector<8x128xf32>,
    return
  }
  func.func @transform_0(%arg0: i32) -> (i32, i32) {
    %c0_i32 = arith.constant 0 : i32
    %c0_i32_0 = arith.constant 0 : i32
    return %arg0, %c0_i32 : i32, i32
  }
  func.func @transform_1(%arg0: i32) -> (i32, i32) {
    %c0_i32 = arith.constant 0 : i32
    %c0_i32_0 = arith.constant 0 : i32
    %c0_i32_1 = arith.constant 0 : i32
    return %c0_i32, %c0_i32_0 : i32, i32
  }
  func.func @transform_2(%arg0: i32) -> (i32, i32) {
    %c0_i32 = arith.constant 0 : i32
    %c0_i32_0 = arith.constant 0 : i32
    %c0_i32_1 = arith.constant 0 : i32
    return %c0_i32, %c0_i32_0 : i32, i32
  }
  func.func @transform_3(%arg0: i32) -> (i32, i32) {
    %c0_i32 = arith.constant 0 : i32
    %c0_i32_0 = arith.constant 0 : i32
    %c0_i32_1 = arith.constant 0 : i32
    return %c0_i32, %c0_i32_0 : i32, i32
  }
  func.func @transform_4(%arg0: i32) -> (i32, i32) {
    %c0_i32 = arith.constant 0 : i32
    %c0_i32_0 = arith.constant 0 : i32
    %c0_i32_1 = arith.constant 0 : i32
    return %c0_i32, %c0_i32_0 : i32, i32
  }
  func.func @transform_5(%arg0: i32) -> (i32, i32) {
    %c0_i32 = arith.constant 0 : i32
    %c0_i32_0 = arith.constant 0 : i32
    return %arg0, %c0_i32 : i32, i32
  }
}

module attributes {stable_mosaic.version = 11 : i64} {
  func.func @critic_kernel(%arg0: i32, %arg1: memref<8x16xf32, #tpu.memory_space<vmem>>, %arg2: memref<16x32xbf16, #tpu.memory_space<vmem>>, %arg3: memref<32x32xbf16, #tpu.memory_space<vmem>>, %arg4: memref<32x128xbf16, #tpu.memory_space<vmem>>, %arg5: memref<8x128xf32, #tpu.memory_space<vmem>>, %arg6: memref<8x128xf32, #tpu.memory_space<vmem>>) attributes {dimension_semantics = [#tpu.dimension_semantics<parallel>], iteration_bounds = array<i64: 2>, scalar_prefetch = 0 : i64, scratch_operands = 0 : i64, tpu.core_type = #tpu.core_type<tc>, window_params = [{transform_indices = @transform_0, window_bounds = array<i64: 8, 16>}, {pipeline_mode = #tpu.pipeline_mode<synchronous>, transform_indices = @transform_1, window_bounds = array<i64: 16, 32>}, {pipeline_mode = #tpu.pipeline_mode<synchronous>, transform_indices = @transform_2, window_bounds = array<i64: 32, 32>}, {pipeline_mode = #tpu.pipeline_mode<synchronous>, transform_indices = @transform_3, window_bounds = array<i64: 32, 128>}, {pipeline_mode = #tpu.pipeline_mode<synchronous>, transform_indices = @transform_4, window_bounds = array<i64: 8, 128>}, {transform_indices = @transform_5, window_bounds = array<i64: 8, 128>}]} {
    %c0 = arith.constant 0 : index
    %c0_0 = arith.constant 0 : index
    %0 = vector.load %arg1[%c0, %c0_0] : memref<8x16xf32, #tpu.memory_space<vmem>>, vector<8x16xf32>
    %1 = arith.truncf %0 : vector<8x16xf32> to vector<8x16xbf16>
    %c0_1 = arith.constant 0 : index
    %c0_2 = arith.constant 0 : index
    %2 = vector.load %arg2[%c0_1, %c0_2] : memref<16x32xbf16, #tpu.memory_space<vmem>>, vector<16x32xbf16>
    %cst = arith.constant dense<0.000000e+00> : vector<8x32xf32>
    %3 = tpu.matmul %1, %2, %cst {dimension_numbers = #tpu.dot_dimension_numbers<[1], [0], [0], [1], [0, 0, 1, 1], [], []>} : vector<8x16xbf16>, vector<16x32xbf16>, vector<8x32xf32> -> vector<8x32xf32>
    %c0_3 = arith.constant 0 : index
    %c0_4 = arith.constant 0 : index
    %4 = vector.load %arg5[%c0_3, %c0_4] : memref<8x128xf32, #tpu.memory_space<vmem>>, vector<1x32xf32>
    %5 = vector.broadcast %4 : vector<1x32xf32> to vector<8x32xf32>
    %6 = arith.addf %3, %5 : vector<8x32xf32>
    %c1 = arith.constant 1 : index
    %c0_5 = arith.constant 0 : index
    %7 = vector.load %arg5[%c1, %c0_5] : memref<8x128xf32, #tpu.memory_space<vmem>>, vector<1x32xf32>
    %c2 = arith.constant 2 : index
    %c0_6 = arith.constant 0 : index
    %8 = vector.load %arg5[%c2, %c0_6] : memref<8x128xf32, #tpu.memory_space<vmem>>, vector<1x32xf32>
    %cst_7 = arith.constant dense<0.000000e+00> : vector<8xf32>
    %9 = vector.multi_reduction <add>, %6, %cst_7 [1] : vector<8x32xf32> to vector<8xf32>
    %10 = vector.shape_cast %9 : vector<8xf32> to vector<8x1xf32>
    %cst_8 = arith.constant 3.125000e-02 : f32
    %11 = vector.broadcast %cst_8 : f32 to vector<8x1xf32>
    %12 = arith.mulf %10, %11 : vector<8x1xf32>
    %13 = arith.mulf %6, %6 : vector<8x32xf32>
    %cst_9 = arith.constant dense<0.000000e+00> : vector<8xf32>
    %14 = vector.multi_reduction <add>, %13, %cst_9 [1] : vector<8x32xf32> to vector<8xf32>
    %15 = vector.shape_cast %14 : vector<8xf32> to vector<8x1xf32>
    %cst_10 = arith.constant 3.125000e-02 : f32
    %16 = vector.broadcast %cst_10 : f32 to vector<8x1xf32>
    %17 = arith.mulf %15, %16 : vector<8x1xf32>
    %18 = arith.mulf %12, %12 : vector<8x1xf32>
    %19 = arith.subf %17, %18 : vector<8x1xf32>
    %cst_11 = arith.constant 0.000000e+00 : f32
    %20 = vector.broadcast %cst_11 : f32 to vector<8x1xf32>
    %21 = arith.maximumf %19, %20 : vector<8x1xf32>
    %22 = vector.broadcast %12 : vector<8x1xf32> to vector<8x32xf32>
    %23 = arith.subf %6, %22 : vector<8x32xf32>
    %cst_12 = arith.constant 9.99999974E-6 : f32
    %24 = vector.broadcast %cst_12 : f32 to vector<8x1xf32>
    %25 = arith.addf %21, %24 : vector<8x1xf32>
    %26 = math.rsqrt %25 : vector<8x1xf32>
    %27 = vector.broadcast %26 : vector<8x1xf32> to vector<8x32xf32>
    %28 = arith.mulf %23, %27 : vector<8x32xf32>
    %29 = vector.broadcast %7 : vector<1x32xf32> to vector<8x32xf32>
    %30 = arith.mulf %28, %29 : vector<8x32xf32>
    %31 = vector.broadcast %8 : vector<1x32xf32> to vector<8x32xf32>
    %32 = arith.addf %30, %31 : vector<8x32xf32>
    %cst_13 = arith.constant 0.000000e+00 : f32
    %33 = vector.broadcast %cst_13 : f32 to vector<8x32xf32>
    %34 = arith.maximumf %32, %33 : vector<8x32xf32>
    %35 = arith.truncf %34 : vector<8x32xf32> to vector<8x32xbf16>
    %c0_14 = arith.constant 0 : index
    %c0_15 = arith.constant 0 : index
    %36 = vector.load %arg3[%c0_14, %c0_15] : memref<32x32xbf16, #tpu.memory_space<vmem>>, vector<32x32xbf16>
    %cst_16 = arith.constant dense<0.000000e+00> : vector<8x32xf32>
    %37 = tpu.matmul %35, %36, %cst_16 {dimension_numbers = #tpu.dot_dimension_numbers<[1], [0], [0], [1], [0, 0, 1, 1], [], []>} : vector<8x32xbf16>, vector<32x32xbf16>, vector<8x32xf32> -> vector<8x32xf32>
    %c3 = arith.constant 3 : index
    %c0_17 = arith.constant 0 : index
    %38 = vector.load %arg5[%c3, %c0_17] : memref<8x128xf32, #tpu.memory_space<vmem>>, vector<1x32xf32>
    %39 = vector.broadcast %38 : vector<1x32xf32> to vector<8x32xf32>
    %40 = arith.addf %37, %39 : vector<8x32xf32>
    %c4 = arith.constant 4 : index
    %c0_18 = arith.constant 0 : index
    %41 = vector.load %arg5[%c4, %c0_18] : memref<8x128xf32, #tpu.memory_space<vmem>>, vector<1x32xf32>
    %c5 = arith.constant 5 : index
    %c0_19 = arith.constant 0 : index
    %42 = vector.load %arg5[%c5, %c0_19] : memref<8x128xf32, #tpu.memory_space<vmem>>, vector<1x32xf32>
    %cst_20 = arith.constant dense<0.000000e+00> : vector<8xf32>
    %43 = vector.multi_reduction <add>, %40, %cst_20 [1] : vector<8x32xf32> to vector<8xf32>
    %44 = vector.shape_cast %43 : vector<8xf32> to vector<8x1xf32>
    %cst_21 = arith.constant 3.125000e-02 : f32
    %45 = vector.broadcast %cst_21 : f32 to vector<8x1xf32>
    %46 = arith.mulf %44, %45 : vector<8x1xf32>
    %47 = arith.mulf %40, %40 : vector<8x32xf32>
    %cst_22 = arith.constant dense<0.000000e+00> : vector<8xf32>
    %48 = vector.multi_reduction <add>, %47, %cst_22 [1] : vector<8x32xf32> to vector<8xf32>
    %49 = vector.shape_cast %48 : vector<8xf32> to vector<8x1xf32>
    %cst_23 = arith.constant 3.125000e-02 : f32
    %50 = vector.broadcast %cst_23 : f32 to vector<8x1xf32>
    %51 = arith.mulf %49, %50 : vector<8x1xf32>
    %52 = arith.mulf %46, %46 : vector<8x1xf32>
    %53 = arith.subf %51, %52 : vector<8x1xf32>
    %cst_24 = arith.constant 0.000000e+00 : f32
    %54 = vector.broadcast %cst_24 : f32 to vector<8x1xf32>
    %55 = arith.maximumf %53, %54 : vector<8x1xf32>
    %56 = vector.broadcast %46 : vector<8x1xf32> to vector<8x32xf32>
    %57 = arith.subf %40, %56 : vector<8x32xf32>
    %cst_25 = arith.constant 9.99999974E-6 : f32
    %58 = vector.broadcast %cst_25 : f32 to vector<8x1xf32>
    %59 = arith.addf %55, %58 : vector<8x1xf32>
    %60 = math.rsqrt %59 : vector<8x1xf32>
    %61 = vector.broadcast %60 : vector<8x1xf32> to vector<8x32xf32>
    %62 = arith.mulf %57, %61 : vector<8x32xf32>
    %63 = vector.broadcast %41 : vector<1x32xf32> to vector<8x32xf32>
    %64 = arith.mulf %62, %63 : vector<8x32xf32>
    %65 = vector.broadcast %42 : vector<1x32xf32> to vector<8x32xf32>
    %66 = arith.addf %64, %65 : vector<8x32xf32>
    %cst_26 = arith.constant 0.000000e+00 : f32
    %67 = vector.broadcast %cst_26 : f32 to vector<8x32xf32>
    %68 = arith.maximumf %66, %67 : vector<8x32xf32>
    %69 = arith.truncf %68 : vector<8x32xf32> to vector<8x32xbf16>
    %c0_27 = arith.constant 0 : index
    %c0_28 = arith.constant 0 : index
    %70 = vector.load %arg4[%c0_27, %c0_28] : memref<32x128xbf16, #tpu.memory_space<vmem>>, vector<32x128xbf16>
    %cst_29 = arith.constant dense<0.000000e+00> : vector<8x128xf32>
    %71 = tpu.matmul %69, %70, %cst_29 {dimension_numbers = #tpu.dot_dimension_numbers<[1], [0], [0], [1], [0, 0, 1, 1], [], []>} : vector<8x32xbf16>, vector<32x128xbf16>, vector<8x128xf32> -> vector<8x128xf32>
    %c6 = arith.constant 6 : index
    %c0_30 = arith.constant 0 : index
    %72 = vector.load %arg5[%c6, %c0_30] : memref<8x128xf32, #tpu.memory_space<vmem>>, vector<1x128xf32>
    %73 = vector.broadcast %72 : vector<1x128xf32> to vector<8x128xf32>
    %74 = arith.addf %71, %73 : vector<8x128xf32>
    %c0_31 = arith.constant 0 : index
    %c0_32 = arith.constant 0 : index
    %75 = vector.load %arg6[%c0_31, %c0_32] : memref<8x128xf32, #tpu.memory_space<vmem>>, vector<8x128xf32>
    tpu.vector_store %arg6[%c0_31, %c0_32], %74 {strides = array<i32>} : memref<8x128xf32, #tpu.memory_space<vmem>>, vector<8x128xf32>,
    return
  }
  func.func @transform_0(%arg0: i32) -> (i32, i32) {
    %c0_i32 = arith.constant 0 : i32
    %c0_i32_0 = arith.constant 0 : i32
    return %arg0, %c0_i32 : i32, i32
  }
  func.func @transform_1(%arg0: i32) -> (i32, i32) {
    %c0_i32 = arith.constant 0 : i32
    %c0_i32_0 = arith.constant 0 : i32
    %c0_i32_1 = arith.constant 0 : i32
    return %c0_i32, %c0_i32_0 : i32, i32
  }
  func.func @transform_2(%arg0: i32) -> (i32, i32) {
    %c0_i32 = arith.constant 0 : i32
    %c0_i32_0 = arith.constant 0 : i32
    %c0_i32_1 = arith.constant 0 : i32
    return %c0_i32, %c0_i32_0 : i32, i32
  }
  func.func @transform_3(%arg0: i32) -> (i32, i32) {
    %c0_i32 = arith.constant 0 : i32
    %c0_i32_0 = arith.constant 0 : i32
    %c0_i32_1 = arith.constant 0 : i32
    return %c0_i32, %c0_i32_0 : i32, i32
  }
  func.func @transform_4(%arg0: i32) -> (i32, i32) {
    %c0_i32 = arith.constant 0 : i32
    %c0_i32_0 = arith.constant 0 : i32
    %c0_i32_1 = arith.constant 0 : i32
    return %c0_i32, %c0_i32_0 : i32, i32
  }
  func.func @transform_5(%arg0: i32) -> (i32, i32) {
    %c0_i32 = arith.constant 0 : i32
    %c0_i32_0 = arith.constant 0 : i32
    return %arg0, %c0_i32 : i32, i32
  }
}

</mosaic_0001>

<llo_original>
// kernel: tpu_custom_call.1
$region0: #{tpu_custom_call.1}
  #allocation0 [shape = 'u32[]', space=smem, size = 0x4, offset = 0x4, fixed_abs, tag = 'smem constant byte address 0x4 - core index']
  #allocation1 [shape = 'u32[72,128]{1,0:T(1,128)}', space=vmem, size = 0x9000, scoped, tag = 'internal scratch']
  %s0 = inlined_call_operand.hbm [shape: f32[16,16], index: 0, kind: input, shape index: {}]
  %s1 = inlined_call_operand.hbm [shape: bf16[16,32], index: 1, kind: input, shape index: {}]
  %s2 = inlined_call_operand.hbm [shape: bf16[32,32], index: 2, kind: input, shape index: {}]
  %s3 = inlined_call_operand.hbm [shape: bf16[32,128], index: 3, kind: input, shape index: {}]
  %s4 = inlined_call_operand.hbm [shape: f32[8,128], index: 4, kind: input, shape index: {}]
  %s5 = inlined_call_operand.hbm [shape: f32[16,128], index: 5, kind: output, shape index: {}]
  %s6 = sld [smem:[#allocation0]]
  $region73: #{tpu_custom_call.1} parent=0
    _
  %s8 = ssub.s32 1, %s6
  %s9 = scalar_select 0, %s8, %s6
  $region1: #{tpu_custom_call.1} parent=0
    #allocation2 [shape = 'u8[8192]{0}', space=vmem, size = 0x2000, scoped, tag = 'input window, operand 0']
    #allocation3 [shape = 's32[2]{0}', space=sflag, size = 0x8, scoped, tag = 'scoped memory for tpu_custom_call.1']
    #allocation4 [shape = 's32[2]{0}', space=sflag, size = 0x8, scoped, tag = 'scoped memory for tpu_custom_call.1']
    #allocation5 [shape = 'u8[4096]{0}', space=vmem, size = 0x1000, scoped, tag = 'input window, operand 1, single buffered']
    #allocation6 [shape = 's32[1]{0}', space=sflag, size = 0x4, scoped, tag = 'scoped memory for tpu_custom_call.1']
    #allocation7 [shape = 'u8[8192]{0}', space=vmem, size = 0x2000, scoped, tag = 'input window, operand 2, single buffered']
    #allocation8 [shape = 'u8[8192]{0}', space=vmem, size = 0x2000, scoped, tag = 'input window, operand 3, single buffered']
    #allocation9 [shape = 's32[1]{0}', space=sflag, size = 0x4, scoped, tag = 'scoped memory for tpu_custom_call.1']
    #allocation10 [shape = 'u8[4096]{0}', space=vmem, size = 0x1000, scoped, tag = 'input window, operand 4, single buffered']
    #allocation11 [shape = 'u8[8192]{0}', space=vmem, size = 0x2000, scoped, tag = 'output window, operand 0']
    %10 = vsyncpa [#allocation3], 0
    %s11 = scalar_lea.sflag [#allocation3], 1
    %12 = vsyncpa %s11, 0
    %13 = vsyncpa [#allocation6], 0
    %14 = vsyncpa [#allocation9], 0
    %15 = vsyncpa [#allocation4], 0
    %s16 = scalar_lea.sflag [#allocation4], 1
    %17 = vsyncpa %s16, 0
    loop: start=0, step=1, limit=4
    $region2: #{tpu_custom_call.1} parent=1 // loop_pre_header
      _
    $region3: #{tpu_custom_call.1} parent=1 // loop_header
      %s19 = sphi 0, %s23
      %p20 = scmp.ge.s32.totalorder %s19, 4
      %s29 = sphi 0, %s31
      %s32 = sphi 0, %s29
      %s33 = sphi 0, %s32
      %s49 = sphi 0, %s33
      %s53 = sphi 0, %s53
      %s55 = sphi 0, %s53
      %s56 = sphi 0, %s55
      %s70 = sphi 0, %s56
      %s74 = sphi 0, %s74
      %s76 = sphi 0, %s74
      %s77 = sphi 0, %s76
      %s91 = sphi 0, %s77
      %s95 = sphi 0, %s95
      %s97 = sphi 0, %s95
      %s98 = sphi 0, %s97
      %s112 = sphi 0, %s98
      %s116 = sphi 0, %s116
      %s118 = sphi 0, %s116
      %s119 = sphi 0, %s118
      %s133 = sphi 0, %s119
      %s139 = sphi 0, %s141
      %s142 = sphi 0, %s139
      %s143 = sphi 0, %s142
      %s159 = sphi 0, %s143
    $region4: #{tpu_custom_call.1} parent=1 // loop_header_branch
      %22 = sbr.rel (%p20) target = $region8
    $region5: #{tpu_custom_call.1} parent=1 // loop_body
      %s24 = ssub.s32 %s19, 1
      %s25 = ssub.s32 %s19, 2
      %s26 = sadd.s32 %s19, 1
      %s27 = ssub.s32 %s19, %s26
      %p28 = scmp.eq.s32.totalorder %s27, 0
      %s30 = sadd.s32 %s29, 1
      %s31 = scalar_select %p28, %s29, %s30
      %p34 = pneg %p28
      %p35 = scmp.eq.s32.totalorder %s19, 1
      %p36 = por %p34, %p35
      %p37 = scmp.ne.s32.totalorder %s29, %s32
      %p38 = scmp.eq.s32.totalorder %s19, 0
      %p39 = por %p37, %p38
      %p40 = scmp.ne.s32.totalorder %s29, %s32
      %p41 = scmp.eq.s32.totalorder %s24, 1
      %p42 = por %p40, %p41
      %p43 = scmp.ne.s32.totalorder %s32, %s33
      %p44 = scmp.eq.s32.totalorder %s24, 0
      %p45 = por %p43, %p44
      %p46 = scmp.ne.s32.totalorder %s32, %s33
      %p47 = scmp.eq.s32.totalorder %s25, 1
      %p48 = por %p46, %p47
      %p50 = scmp.ne.s32.totalorder %s33, %s49
      %p51 = scmp.eq.s32.totalorder %s25, 0
      %p52 = por %p50, %p51
      %s54 = sadd.s32 %s53, 1
      %p57 = scmp.eq.s32.totalorder %s19, 1
      %p58 = scmp.ne.s32.totalorder %s53, %s55
      %p59 = scmp.eq.s32.totalorder %s19, 0
      %p60 = por %p58, %p59
      %p61 = scmp.ne.s32.totalorder %s53, %s55
      %p62 = scmp.eq.s32.totalorder %s24, 1
      %p63 = por %p61, %p62
      %p64 = scmp.ne.s32.totalorder %s55, %s56
      %p65 = scmp.eq.s32.totalorder %s24, 0
      %p66 = por %p64, %p65
      %p67 = scmp.ne.s32.totalorder %s55, %s56
      %p68 = scmp.eq.s32.totalorder %s25, 1
      %p69 = por %p67, %p68
      %p71 = scmp.ne.s32.totalorder %s56, %s70
      %p72 = scmp.eq.s32.totalorder %s25, 0
      %p73 = por %p71, %p72
      %s75 = sadd.s32 %s74, 1
      %p78 = scmp.eq.s32.totalorder %s19, 1
      %p79 = scmp.ne.s32.totalorder %s74, %s76
      %p80 = scmp.eq.s32.totalorder %s19, 0
      %p81 = por %p79, %p80
      %p82 = scmp.ne.s32.totalorder %s74, %s76
      %p83 = scmp.eq.s32.totalorder %s24, 1
      %p84 = por %p82, %p83
      %p85 = scmp.ne.s32.totalorder %s76, %s77
      %p86 = scmp.eq.s32.totalorder %s24, 0
      %p87 = por %p85, %p86
      %p88 = scmp.ne.s32.totalorder %s76, %s77
      %p89 = scmp.eq.s32.totalorder %s25, 1
      %p90 = por %p88, %p89
      %p92 = scmp.ne.s32.totalorder %s77, %s91
      %p93 = scmp.eq.s32.totalorder %s25, 0
      %p94 = por %p92, %p93
      %s96 = sadd.s32 %s95, 1
      %p99 = scmp.eq.s32.totalorder %s19, 1
      %p100 = scmp.ne.s32.totalorder %s95, %s97
      %p101 = scmp.eq.s32.totalorder %s19, 0
      %p102 = por %p100, %p101
      %p103 = scmp.ne.s32.totalorder %s95, %s97
      %p104 = scmp.eq.s32.totalorder %s24, 1
      %p105 = por %p103, %p104
      %p106 = scmp.ne.s32.totalorder %s97, %s98
      %p107 = scmp.eq.s32.totalorder %s24, 0
      %p108 = por %p106, %p107
      %p109 = scmp.ne.s32.totalorder %s97, %s98
      %p110 = scmp.eq.s32.totalorder %s25, 1
      %p111 = por %p109, %p110
      %p113 = scmp.ne.s32.totalorder %s98, %s112
      %p114 = scmp.eq.s32.totalorder %s25, 0
      %p115 = por %p113, %p114
      %s117 = sadd.s32 %s116, 1
      %p120 = scmp.eq.s32.totalorder %s19, 1
      %p121 = scmp.ne.s32.totalorder %s116, %s118
      %p122 = scmp.eq.s32.totalorder %s19, 0
      %p123 = por %p121, %p122
      %p124 = scmp.ne.s32.totalorder %s116, %s118
      %p125 = scmp.eq.s32.totalorder %s24, 1
      %p126 = por %p124, %p125
      %p127 = scmp.ne.s32.totalorder %s118, %s119
      %p128 = scmp.eq.s32.totalorder %s24, 0
      %p129 = por %p127, %p128
      %p130 = scmp.ne.s32.totalorder %s118, %s119
      %p131 = scmp.eq.s32.totalorder %s25, 1
      %p132 = por %p130, %p131
      %p134 = scmp.ne.s32.totalorder %s119, %s133
      %p135 = scmp.eq.s32.totalorder %s25, 0
      %p136 = por %p134, %p135
      %s137 = ssub.s32 %s19, %s26
      %p138 = scmp.eq.s32.totalorder %s137, 0
      %s140 = sadd.s32 %s139, 1
      %s141 = scalar_select %p138, %s139, %s140
      %p144 = pneg %p138
      %p145 = scmp.eq.s32.totalorder %s19, 1
      %p146 = por %p144, %p145
      %p147 = scmp.ne.s32.totalorder %s139, %s142
      %p148 = scmp.eq.s32.totalorder %s19, 0
      %p149 = por %p147, %p148
      %p150 = scmp.ne.s32.totalorder %s139, %s142
      %p151 = scmp.eq.s32.totalorder %s24, 1
      %p152 = por %p150, %p151
      %p153 = scmp.ne.s32.totalorder %s142, %s143
      %p154 = scmp.eq.s32.totalorder %s24, 0
      %p155 = por %p153, %p154
      %p156 = scmp.ne.s32.totalorder %s142, %s143
      %p157 = scmp.eq.s32.totalorder %s25, 1
      %p158 = por %p156, %p157
      %p160 = scmp.ne.s32.totalorder %s143, %s159
      %p161 = scmp.eq.s32.totalorder %s25, 0
      %p162 = por %p160, %p161
      %p163 = scmp.le.s32.totalorder 1, %s19
      %p164 = scmp.lt.s32.totalorder %s19, 3
      %p165 = pnand %p163, %p164
      %p166 = pneg %p165
      // Predicated region
      $region9: #{tpu_custom_call.1} parent=5 // pred_check
        _
      $region10: #{tpu_custom_call.1} parent=5 // pred_check_branch
        %168 = sbr.rel (%p165) target = $region12
      $region11: #{tpu_custom_call.1} parent=5 // pred_region
        %s169 = ssub.s32 %s19, 1
        // Predicated region
        $region13: #{tpu_custom_call.1} parent=11 // pred_check
          %p170 = pneg %p66
        $region14: #{tpu_custom_call.1} parent=11 // pred_check_branch
          %172 = sbr.rel (%p170) target = $region16
        $region15: #{tpu_custom_call.1} parent=11 // pred_region
          %174 = vsyncadd [#allocation6], 0
          %s175 = sshll.u32 %s1, 4
          %s176 = int_to_ptr.hbm [resolvable:$true] %s175
          %s177 = sshll.u32 [#allocation5], 4
          %s178 = int_to_ptr.vmem [resolvable:$true] %s177
          %183 = dma.hbm_to_vmem [thread:$0]  %s176, 128, %s178, [#allocation6], 64, 64, 4
        $region16: #{tpu_custom_call.1} parent=11 // pred_fallthru
          _
        // Predicated region
        $region17: #{tpu_custom_call.1} parent=11 // pred_check
          %p184 = pneg %p87
        $region18: #{tpu_custom_call.1} parent=11 // pred_check_branch
          %186 = sbr.rel (%p184) target = $region20
        $region19: #{tpu_custom_call.1} parent=11 // pred_region
          %188 = vsyncadd [#allocation6], 0
          %s189 = sshll.u32 %s2, 4
          %s190 = int_to_ptr.hbm [resolvable:$true] %s189
          %s191 = sshll.u32 [#allocation7], 4
          %s192 = int_to_ptr.vmem [resolvable:$true] %s191
          %197 = dma.hbm_to_vmem [thread:$0]  %s190, 256, %s192, [#allocation6], 64, 64, 4
        $region20: #{tpu_custom_call.1} parent=11 // pred_fallthru
          _
        // Predicated region
        $region21: #{tpu_custom_call.1} parent=11 // pred_check
          %p198 = pneg %p108
        $region22: #{tpu_custom_call.1} parent=11 // pred_check_branch
          %200 = sbr.rel (%p198) target = $region24
        $region23: #{tpu_custom_call.1} parent=11 // pred_region
          %202 = vsyncadd [#allocation9], 0
          %s203 = sshll.u32 %s3, 4
          %s204 = int_to_ptr.hbm [resolvable:$true] %s203
          %s205 = sshll.u32 [#allocation8], 4
          %s206 = int_to_ptr.vmem [resolvable:$true] %s205
          %211 = dma.hbm_to_vmem [thread:$0]  %s204, 256, %s206, [#allocation9], 64, 64, 4
        $region24: #{tpu_custom_call.1} parent=11 // pred_fallthru
          _
        // Predicated region
        $region25: #{tpu_custom_call.1} parent=11 // pred_check
          %p212 = pneg %p129
        $region26: #{tpu_custom_call.1} parent=11 // pred_check_branch
          %214 = sbr.rel (%p212) target = $region28
        $region27: #{tpu_custom_call.1} parent=11 // pred_region
          %216 = vsyncadd [#allocation9], 0
          %s218 = sshll.u32 %s4, 4
          %s219 = int_to_ptr.hbm [resolvable:$true] %s218
          %s220 = sshll.u32 [#allocation10], 4
          %s221 = int_to_ptr.vmem [resolvable:$true] %s220
          %223 = dma.hbm_to_vmem [thread:$0]  %s219, 128, %s221, [#allocation9]
        $region28: #{tpu_custom_call.1} parent=11 // pred_fallthru
          _
      $region12: #{tpu_custom_call.1} parent=5 // pred_fallthru
        _
      %p224 = scmp.lt.s32.totalorder %s19, 2
      // Predicated region
      $region29: #{tpu_custom_call.1} parent=5 // pred_check
        %p225 = pneg %p224
      $region30: #{tpu_custom_call.1} parent=5 // pred_check_branch
        %227 = sbr.rel (%p225) target = $region32
      $region31: #{tpu_custom_call.1} parent=5 // pred_region
        // Predicated region
        $region33: #{tpu_custom_call.1} parent=31 // pred_check
          %p228 = pneg %p39
        $region34: #{tpu_custom_call.1} parent=31 // pred_check_branch
          %230 = sbr.rel (%p228) target = $region36
        $region35: #{tpu_custom_call.1} parent=31 // pred_region
          %s231 = sand.u32 %s29, 1
          %s232 = scalar_lea.sflag [#allocation3], %s231
          %s233 = sand.u32 %s29, 1
          %s234 = smul.addr %s233, 8
          %s235 = scalar_lea.vmem [#allocation2], %s234
          %237 = vsyncadd %s232, 0
          %s238 = smul.addr %s19, 8
          %s239 = scalar_lea.hbm %s0, %s238
          %s241 = sshll.u32 %s239, 4
          %s242 = int_to_ptr.hbm [resolvable:$true] %s241
          %s243 = sshll.u32 %s235, 4
          %s244 = int_to_ptr.vmem [resolvable:$true] %s243
          %246 = dma.hbm_to_vmem [thread:$0]  %s242, 128, %s244, %s232
        $region36: #{tpu_custom_call.1} parent=31 // pred_fallthru
          _
      $region32: #{tpu_custom_call.1} parent=5 // pred_fallthru
        _
      %p247 = scmp.le.s32.totalorder 1, %s19
      %p248 = scmp.lt.s32.totalorder %s19, 3
      %p249 = pnand %p247, %p248
      %p250 = pneg %p249
      // Predicated region
      $region37: #{tpu_custom_call.1} parent=5 // pred_check
        _
      $region38: #{tpu_custom_call.1} parent=5 // pred_check_branch
        %252 = sbr.rel (%p249) target = $region40
      $region39: #{tpu_custom_call.1} parent=5 // pred_region
        %s253 = ssub.s32 %s19, 1
        %s254 = sand.u32 %s32, 1
        %s255 = scalar_lea.sflag [#allocation3], %s254
        %s256 = sand.u32 %s32, 1
        %s257 = smul.addr %s256, 8
        %s258 = scalar_lea.vmem [#allocation2], %s257
        // Predicated region
        $region41: #{tpu_custom_call.1} parent=39 // pred_check
          %p259 = pneg %p45
        $region42: #{tpu_custom_call.1} parent=39 // pred_check_branch
          %261 = sbr.rel (%p259) target = $region44
        $region43: #{tpu_custom_call.1} parent=39 // pred_region
          %263 = dma.done %s255, 128
        $region44: #{tpu_custom_call.1} parent=39 // pred_fallthru
          _
        // Predicated region
        $region45: #{tpu_custom_call.1} parent=39 // pred_check
          %p264 = pneg %p66
        $region46: #{tpu_custom_call.1} parent=39 // pred_check_branch
          %266 = sbr.rel (%p264) target = $region48
        $region47: #{tpu_custom_call.1} parent=39 // pred_region
          %268 = dma.done [#allocation6], 128
        $region48: #{tpu_custom_call.1} parent=39 // pred_fallthru
          _
        // Predicated region
        $region49: #{tpu_custom_call.1} parent=39 // pred_check
          %p269 = pneg %p87
        $region50: #{tpu_custom_call.1} parent=39 // pred_check_branch
          %271 = sbr.rel (%p269) target = $region52
        $region51: #{tpu_custom_call.1} parent=39 // pred_region
          %273 = dma.done [#allocation6], 256
        $region52: #{tpu_custom_call.1} parent=39 // pred_fallthru
          _
        // Predicated region
        $region53: #{tpu_custom_call.1} parent=39 // pred_check
          %p274 = pneg %p108
        $region54: #{tpu_custom_call.1} parent=39 // pred_check_branch
          %276 = sbr.rel (%p274) target = $region56
        $region55: #{tpu_custom_call.1} parent=39 // pred_region
          %278 = dma.done [#allocation9], 256
        $region56: #{tpu_custom_call.1} parent=39 // pred_fallthru
          _
        // Predicated region
        $region57: #{tpu_custom_call.1} parent=39 // pred_check
          %p279 = pneg %p129
        $region58: #{tpu_custom_call.1} parent=39 // pred_check_branch
          %281 = sbr.rel (%p279) target = $region60
        $region59: #{tpu_custom_call.1} parent=39 // pred_region
          %283 = dma.done [#allocation9], 128
        $region60: #{tpu_custom_call.1} parent=39 // pred_fallthru
          _
        %s284 = sand.u32 %s32, 1
        %s285 = scalar_lea.sflag [#allocation3], %s284
        %s286 = sand.u32 %s32, 1
        %s287 = smul.addr %s286, 8
        %s288 = scalar_lea.vmem [#allocation2], %s287
        %p289 = pneg %p45
        %p290 = pneg %p42
        %p291 = pneg %p66
        %p292 = pneg %p63
        %p293 = pneg %p87
        %p294 = pneg %p84
        %p295 = pneg %p108
        %p296 = pneg %p105
        %p297 = pneg %p129
        %p298 = pneg %p126
        %p299 = pneg %p155
        %p300 = pneg %p152
        %s301 = sand.u32 %s142, 1
        %s302 = scalar_lea.sflag [#allocation4], %s301
        %s303 = sand.u32 %s142, 1
        %s304 = smul.addr %s303, 8
        %s305 = scalar_lea.vmem [#allocation11], %s304
        %v307 = vld [vmem:[%s258] sm:$0xff]
        %v308 = vpack.c.bf16 %v307, %v307
        %v309 = vld [vmem:[#allocation5] sm:$0xf]
        %v310 = vld [vmem:[#allocation5 + $0x4] sm:$0xf]
        %v311 = vld [vmem:[#allocation10] sm:$0x1]
        %v312 = vperm.slane %v311, 0
        %v315 = vunpack.c.l.b16 %v309
        %v316 = vunpack.c.l.b16 %v310
        %v317 = vpack.c.b16 %v316, %v315
        %vm319 = vcmask 130048
        %v321 = vsel %vm319, %v308, 0
        %323 = vmatpush.bf16.msra.mxu0 0
        %324 = vmatpush.bf16.msra.mxu0 0
        %325 = vmatpush.bf16.msra.mxu0 0
        %326 = vmatpush.bf16.msra.mxu0 0
        %327 = vmatpush.bf16.msra.mxu0 0
        %328 = vmatpush.bf16.msra.mxu0 0
        %329 = vmatpush.bf16.msra.mxu0 0
        %330 = vmatpush.bf16.msra.mxu0 %v317
        %331 = vmatmul.bf16.gmra.mxu0 %v321
        %v332 = vpop.f32.mrf.mxu0
        %v333 = vadd.f32 %v312, %v332
        %v334 = vpop.f32.mrf.mxu0
        %335 = vdwg.mxu0
        %v336 = vld [vmem:[#allocation10 + $0x1] sm:$0x1]
        %v337 = vld [vmem:[#allocation10 + $0x2] sm:$0x1]
        %vm338 = vcmask 261120
        %v339 = vsel %vm338, %v333, 0.0
        %340 = vadd.xlane.f32.xlu0 %v339
        %v341 = vpop.xlane.xlu0 %340
        %v342 = vmul.f32 %v341, 0.03125
        %v343 = vmul.f32 %v333, %v333
        %v344 = vsel %vm338, %v343, 0.0
        %345 = vadd.xlane.f32.xlu0 %v344
        %v346 = vpop.xlane.xlu0 %345
        %v347 = vmul.f32 %v346, 0.03125
        %v348 = vmul.f32 %v342, %v342
        %v349 = vsub.f32 %v347, %v348
        %v350 = vmax.f32 %v349, 0.0
        %v351 = vsub.f32 %v333, %v342
        %v352 = vadd.f32 %v350, 1e-05
        %v353 = vrsqrt.pop %v352
        %v354 = vmul.f32 %v353, %v352
        %v355 = vmul.f32 %v354, %v353
        %v356 = vmul.f32 0.5, %v355
        %v357 = vsub.f32 1.5, %v356
        %v358 = vmul.f32 %v353, %v357
        %vm359 = vweird.f32 %v352
        %vm360 = vweird.f32 %v353
        %vm361 = vmor %vm359, %vm360
        %v362 = vsel %vm361, %v353, %v358
        %v363 = vmul.f32 %v351, %v362
        %v364 = vperm.slane %v336, 0
        %v365 = vmul.f32 %v363, %v364
        %v366 = vperm.slane %v337, 0
        %v367 = vadd.f32 %v365, %v366
        %v368 = vmax.f32 %v367, 0.0
        %v369 = vpack.c.bf16 %v368, %v368
        %v370 = vld [vmem:[#allocation7] sm:$0xf]
        %v371 = vld [vmem:[#allocation7 + $0x4] sm:$0xf]
        %v372 = vld [vmem:[#allocation7 + $0x8] sm:$0xf]
        %v373 = vld [vmem:[#allocation7 + $0xc] sm:$0xf]
        %v374 = vld [vmem:[#allocation10 + $0x3] sm:$0x1]
        %v375 = vperm.slane %v374, 0
        %v380 = vunpack.c.l.b16 %v370
        %v381 = vunpack.c.l.b16 %v371
        %v382 = vunpack.c.l.b16 %v372
        %v383 = vunpack.c.l.b16 %v373
        %v384 = vpack.c.b16 %v381, %v380
        %v385 = vpack.c.b16 %v383, %v382
        %v389 = vsel %vm338, %v369, 0
        %391 = vmatpush.bf16.msra.mxu0 0
        %392 = vmatpush.bf16.msra.mxu0 0
        %393 = vmatpush.bf16.msra.mxu0 0
        %394 = vmatpush.bf16.msra.mxu0 0
        %395 = vmatpush.bf16.msra.mxu0 0
        %396 = vmatpush.bf16.msra.mxu0 0
        %397 = vmatpush.bf16.msra.mxu0 %v385
        %398 = vmatpush.bf16.msra.mxu0 %v384
        %399 = vmatmul.bf16.gmra.mxu0 %v389
        %v400 = vpop.f32.mrf.mxu0
        %v401 = vadd.f32 %v375, %v400
        %v402 = vpop.f32.mrf.mxu0
        %403 = vdwg.mxu0
        %v404 = vld [vmem:[#allocation10 + $0x4] sm:$0x1]
        %v405 = vld [vmem:[#allocation10 + $0x5] sm:$0x1]
        %v406 = vsel %vm338, %v401, 0.0
        %407 = vadd.xlane.f32.xlu0 %v406
        %v408 = vpop.xlane.xlu0 %407
        %v409 = vmul.f32 %v408, 0.03125
        %v410 = vmul.f32 %v401, %v401
        %v411 = vsel %vm338, %v410, 0.0
        %412 = vadd.xlane.f32.xlu0 %v411
        %v413 = vpop.xlane.xlu0 %412
        %v414 = vmul.f32 %v413, 0.03125
        %v415 = vmul.f32 %v409, %v409
        %v416 = vsub.f32 %v414, %v415
        %v417 = vmax.f32 %v416, 0.0
        %v418 = vsub.f32 %v401, %v409
        %v419 = vadd.f32 %v417, 1e-05
        %v420 = vrsqrt.pop %v419
        %v421 = vmul.f32 %v420, %v419
        %v422 = vmul.f32 %v421, %v420
        %v423 = vmul.f32 0.5, %v422
        %v424 = vsub.f32 1.5, %v423
        %v425 = vmul.f32 %v420, %v424
        %vm426 = vweird.f32 %v419
        %vm427 = vweird.f32 %v420
        %vm428 = vmor %vm426, %vm427
        %v429 = vsel %vm428, %v420, %v425
        %v430 = vmul.f32 %v418, %v429
        %v431 = vperm.slane %v404, 0
        %v432 = vmul.f32 %v430, %v431
        %v433 = vperm.slane %v405, 0
        %v434 = vadd.f32 %v432, %v433
        %v435 = vmax.f32 %v434, 0.0
        %v436 = vpack.c.bf16 %v435, %v435
        %v437 = vld [vmem:[#allocation8] sm:$0xf]
        %v438 = vld [vmem:[#allocation8 + $0x4] sm:$0xf]
        %v439 = vld [vmem:[#allocation8 + $0x8] sm:$0xf]
        %v440 = vld [vmem:[#allocation8 + $0xc] sm:$0xf]
        %v441 = vld [vmem:[#allocation10 + $0x6] sm:$0x1]
        %v442 = vperm.slane %v441, 0
        %v447 = vunpack.c.l.b16 %v437
        %v448 = vunpack.c.l.b16 %v438
        %v449 = vunpack.c.l.b16 %v439
        %v450 = vunpack.c.l.b16 %v440
        %v451 = vpack.c.b16 %v448, %v447
        %v452 = vpack.c.b16 %v450, %v449
        %v456 = vsel %vm338, %v436, 0
        %458 = vmatpush.bf16.msra.mxu0 0
        %459 = vmatpush.bf16.msra.mxu0 0
        %460 = vmatpush.bf16.msra.mxu0 0
        %461 = vmatpush.bf16.msra.mxu0 0
        %462 = vmatpush.bf16.msra.mxu0 0
        %463 = vmatpush.bf16.msra.mxu0 0
        %464 = vmatpush.bf16.msra.mxu0 %v452
        %465 = vmatpush.bf16.msra.mxu0 %v451
        %466 = vmatmul.bf16.gmra.mxu0 %v456
        %v467 = vpop.f32.mrf.mxu0
        %v468 = vadd.f32 %v442, %v467
        %v469 = vpop.f32.mrf.mxu0
        %470 = vdwg.mxu0
        %471 = vst [vmem:[%s305] sm:$0xff] %v468
        %s472 = sand.u32 %s142, 1
        %s473 = scalar_lea.sflag [#allocation4], %s472
        %s474 = sand.u32 %s142, 1
        %s475 = smul.addr %s474, 8
        %s476 = scalar_lea.vmem [#allocation11], %s475
        // Predicated region
        $region61: #{tpu_custom_call.1} parent=39 // pred_check
          %p477 = pneg %p152
        $region62: #{tpu_custom_call.1} parent=39 // pred_check_branch
          %479 = sbr.rel (%p477) target = $region64
        $region63: #{tpu_custom_call.1} parent=39 // pred_region
          %481 = vsyncadd %s473, 0
          %s482 = smul.addr %s24, 8
          %s483 = scalar_lea.hbm %s5, %s482
          %s485 = sshll.u32 %s476, 4
          %s486 = int_to_ptr.vmem [resolvable:$true] %s485
          %s487 = sshll.u32 %s483, 4
          %s488 = int_to_ptr.hbm [resolvable:$true] %s487
          %490 = dma.vmem_to_hbm [thread:$0]  %s486, 128, %s488, %s473
        $region64: #{tpu_custom_call.1} parent=39 // pred_fallthru
          _
      $region40: #{tpu_custom_call.1} parent=5 // pred_fallthru
        _
      %p491 = scmp.le.s32.totalorder 2, %s19
      // Predicated region
      $region65: #{tpu_custom_call.1} parent=5 // pred_check
        %p492 = pneg %p491
      $region66: #{tpu_custom_call.1} parent=5 // pred_check_branch
        %494 = sbr.rel (%p492) target = $region68
      $region67: #{tpu_custom_call.1} parent=5 // pred_region
        %s495 = ssub.s32 %s19, 2
        // Predicated region
        $region69: #{tpu_custom_call.1} parent=67 // pred_check
          %p496 = pneg %p158
        $region70: #{tpu_custom_call.1} parent=67 // pred_check_branch
          %498 = sbr.rel (%p496) target = $region72
        $region71: #{tpu_custom_call.1} parent=67 // pred_region
          %s499 = sand.u32 %s143, 1
          %s500 = scalar_lea.sflag [#allocation4], %s499
          %s501 = sand.u32 %s143, 1
          %s502 = smul.addr %s501, 8
          %s503 = scalar_lea.vmem [#allocation11], %s502
          %505 = dma.done %s500, 128
        $region72: #{tpu_custom_call.1} parent=67 // pred_fallthru
          _
      $region68: #{tpu_custom_call.1} parent=5 // pred_fallthru
        _
    $region6: #{tpu_custom_call.1} parent=1 // loop_footer
      %s23 = sadd.s32 1, %s19
    $region7: #{tpu_custom_call.1} parent=1 // loop_footer_branch
      %18 = sbr.rel target = $region3
    $region8: #{tpu_custom_call.1} parent=1 // loop_exit
      _
    %506 = vsyncpa [#allocation3], 1
    %s507 = scalar_lea.sflag [#allocation3], 1
    %508 = vsyncpa %s507, 1
    %509 = vsyncpa [#allocation6], 1
    %510 = vsyncpa [#allocation9], 1
    %511 = vsyncpa [#allocation4], 1
    %s512 = scalar_lea.sflag [#allocation4], 1
    %513 = vsyncpa %s512, 1

// kernel: tpu_custom_call.1
$region0: #{tpu_custom_call.1}
  #allocation0 [shape = 'u32[]', space=smem, size = 0x4, offset = 0x4, fixed_abs, tag = 'smem constant byte address 0x4 - core index']
  #allocation1 [shape = 'u32[72,128]{1,0:T(1,128)}', space=vmem, size = 0x9000, scoped, tag = 'internal scratch']
  %s0 = inlined_call_operand.hbm [shape: f32[16,16], index: 0, kind: input, shape index: {}]
  %s1 = inlined_call_operand.hbm [shape: bf16[16,32], index: 1, kind: input, shape index: {}]
  %s2 = inlined_call_operand.hbm [shape: bf16[32,32], index: 2, kind: input, shape index: {}]
  %s3 = inlined_call_operand.hbm [shape: bf16[32,128], index: 3, kind: input, shape index: {}]
  %s4 = inlined_call_operand.hbm [shape: f32[8,128], index: 4, kind: input, shape index: {}]
  %s5 = inlined_call_operand.hbm [shape: f32[16,128], index: 5, kind: output, shape index: {}]
  %s6 = sld [smem:[#allocation0]]
  $region73: #{tpu_custom_call.1} parent=0
    _
  %s8 = ssub.s32 1, %s6
  %s9 = scalar_select 0, %s8, %s6
  $region1: #{tpu_custom_call.1} parent=0
    #allocation2 [shape = 'u8[8192]{0}', space=vmem, size = 0x2000, scoped, tag = 'input window, operand 0']
    #allocation3 [shape = 's32[2]{0}', space=sflag, size = 0x8, scoped, tag = 'scoped memory for tpu_custom_call.1']
    #allocation4 [shape = 's32[2]{0}', space=sflag, size = 0x8, scoped, tag = 'scoped memory for tpu_custom_call.1']
    #allocation5 [shape = 'u8[4096]{0}', space=vmem, size = 0x1000, scoped, tag = 'input window, operand 1, single buffered']
    #allocation6 [shape = 's32[1]{0}', space=sflag, size = 0x4, scoped, tag = 'scoped memory for tpu_custom_call.1']
    #allocation7 [shape = 'u8[8192]{0}', space=vmem, size = 0x2000, scoped, tag = 'input window, operand 2, single buffered']
    #allocation8 [shape = 'u8[8192]{0}', space=vmem, size = 0x2000, scoped, tag = 'input window, operand 3, single buffered']
    #allocation9 [shape = 's32[1]{0}', space=sflag, size = 0x4, scoped, tag = 'scoped memory for tpu_custom_call.1']
    #allocation10 [shape = 'u8[4096]{0}', space=vmem, size = 0x1000, scoped, tag = 'input window, operand 4, single buffered']
    #allocation11 [shape = 'u8[8192]{0}', space=vmem, size = 0x2000, scoped, tag = 'output window, operand 0']
    %10 = vsyncpa [#allocation3], 0
    %s11 = scalar_lea.sflag [#allocation3], 1
    %12 = vsyncpa %s11, 0
    %13 = vsyncpa [#allocation6], 0
    %14 = vsyncpa [#allocation9], 0
    %15 = vsyncpa [#allocation4], 0
    %s16 = scalar_lea.sflag [#allocation4], 1
    %17 = vsyncpa %s16, 0
    loop: start=0, step=1, limit=4
    $region2: #{tpu_custom_call.1} parent=1 // loop_pre_header
      _
    $region3: #{tpu_custom_call.1} parent=1 // loop_header
      %s19 = sphi 0, %s23
      %p20 = scmp.ge.s32.totalorder %s19, 4
      %s29 = sphi 0, %s31
      %s32 = sphi 0, %s29
      %s33 = sphi 0, %s32
      %s49 = sphi 0, %s33
      %s53 = sphi 0, %s53
      %s55 = sphi 0, %s53
      %s56 = sphi 0, %s55
      %s70 = sphi 0, %s56
      %s74 = sphi 0, %s74
      %s76 = sphi 0, %s74
      %s77 = sphi 0, %s76
      %s91 = sphi 0, %s77
      %s95 = sphi 0, %s95
      %s97 = sphi 0, %s95
      %s98 = sphi 0, %s97
      %s112 = sphi 0, %s98
      %s116 = sphi 0, %s116
      %s118 = sphi 0, %s116
      %s119 = sphi 0, %s118
      %s133 = sphi 0, %s119
      %s139 = sphi 0, %s141
      %s142 = sphi 0, %s139
      %s143 = sphi 0, %s142
      %s159 = sphi 0, %s143
    $region4: #{tpu_custom_call.1} parent=1 // loop_header_branch
      %22 = sbr.rel (%p20) target = $region8
    $region5: #{tpu_custom_call.1} parent=1 // loop_body
      %s24 = ssub.s32 %s19, 1
      %s25 = ssub.s32 %s19, 2
      %s26 = sadd.s32 %s19, 1
      %s27 = ssub.s32 %s19, %s26
      %p28 = scmp.eq.s32.totalorder %s27, 0
      %s30 = sadd.s32 %s29, 1
      %s31 = scalar_select %p28, %s29, %s30
      %p34 = pneg %p28
      %p35 = scmp.eq.s32.totalorder %s19, 1
      %p36 = por %p34, %p35
      %p37 = scmp.ne.s32.totalorder %s29, %s32
      %p38 = scmp.eq.s32.totalorder %s19, 0
      %p39 = por %p37, %p38
      %p40 = scmp.ne.s32.totalorder %s29, %s32
      %p41 = scmp.eq.s32.totalorder %s24, 1
      %p42 = por %p40, %p41
      %p43 = scmp.ne.s32.totalorder %s32, %s33
      %p44 = scmp.eq.s32.totalorder %s24, 0
      %p45 = por %p43, %p44
      %p46 = scmp.ne.s32.totalorder %s32, %s33
      %p47 = scmp.eq.s32.totalorder %s25, 1
      %p48 = por %p46, %p47
      %p50 = scmp.ne.s32.totalorder %s33, %s49
      %p51 = scmp.eq.s32.totalorder %s25, 0
      %p52 = por %p50, %p51
      %s54 = sadd.s32 %s53, 1
      %p57 = scmp.eq.s32.totalorder %s19, 1
      %p58 = scmp.ne.s32.totalorder %s53, %s55
      %p59 = scmp.eq.s32.totalorder %s19, 0
      %p60 = por %p58, %p59
      %p61 = scmp.ne.s32.totalorder %s53, %s55
      %p62 = scmp.eq.s32.totalorder %s24, 1
      %p63 = por %p61, %p62
      %p64 = scmp.ne.s32.totalorder %s55, %s56
      %p65 = scmp.eq.s32.totalorder %s24, 0
      %p66 = por %p64, %p65
      %p67 = scmp.ne.s32.totalorder %s55, %s56
      %p68 = scmp.eq.s32.totalorder %s25, 1
      %p69 = por %p67, %p68
      %p71 = scmp.ne.s32.totalorder %s56, %s70
      %p72 = scmp.eq.s32.totalorder %s25, 0
      %p73 = por %p71, %p72
      %s75 = sadd.s32 %s74, 1
      %p78 = scmp.eq.s32.totalorder %s19, 1
      %p79 = scmp.ne.s32.totalorder %s74, %s76
      %p80 = scmp.eq.s32.totalorder %s19, 0
      %p81 = por %p79, %p80
      %p82 = scmp.ne.s32.totalorder %s74, %s76
      %p83 = scmp.eq.s32.totalorder %s24, 1
      %p84 = por %p82, %p83
      %p85 = scmp.ne.s32.totalorder %s76, %s77
      %p86 = scmp.eq.s32.totalorder %s24, 0
      %p87 = por %p85, %p86
      %p88 = scmp.ne.s32.totalorder %s76, %s77
      %p89 = scmp.eq.s32.totalorder %s25, 1
      %p90 = por %p88, %p89
      %p92 = scmp.ne.s32.totalorder %s77, %s91
      %p93 = scmp.eq.s32.totalorder %s25, 0
      %p94 = por %p92, %p93
      %s96 = sadd.s32 %s95, 1
      %p99 = scmp.eq.s32.totalorder %s19, 1
      %p100 = scmp.ne.s32.totalorder %s95, %s97
      %p101 = scmp.eq.s32.totalorder %s19, 0
      %p102 = por %p100, %p101
      %p103 = scmp.ne.s32.totalorder %s95, %s97
      %p104 = scmp.eq.s32.totalorder %s24, 1
      %p105 = por %p103, %p104
      %p106 = scmp.ne.s32.totalorder %s97, %s98
      %p107 = scmp.eq.s32.totalorder %s24, 0
      %p108 = por %p106, %p107
      %p109 = scmp.ne.s32.totalorder %s97, %s98
      %p110 = scmp.eq.s32.totalorder %s25, 1
      %p111 = por %p109, %p110
      %p113 = scmp.ne.s32.totalorder %s98, %s112
      %p114 = scmp.eq.s32.totalorder %s25, 0
      %p115 = por %p113, %p114
      %s117 = sadd.s32 %s116, 1
      %p120 = scmp.eq.s32.totalorder %s19, 1
      %p121 = scmp.ne.s32.totalorder %s116, %s118
      %p122 = scmp.eq.s32.totalorder %s19, 0
      %p123 = por %p121, %p122
      %p124 = scmp.ne.s32.totalorder %s116, %s118
      %p125 = scmp.eq.s32.totalorder %s24, 1
      %p126 = por %p124, %p125
      %p127 = scmp.ne.s32.totalorder %s118, %s119
      %p128 = scmp.eq.s32.totalorder %s24, 0
      %p129 = por %p127, %p128
      %p130 = scmp.ne.s32.totalorder %s118, %s119
      %p131 = scmp.eq.s32.totalorder %s25, 1
      %p132 = por %p130, %p131
      %p134 = scmp.ne.s32.totalorder %s119, %s133
      %p135 = scmp.eq.s32.totalorder %s25, 0
      %p136 = por %p134, %p135
      %s137 = ssub.s32 %s19, %s26
      %p138 = scmp.eq.s32.totalorder %s137, 0
      %s140 = sadd.s32 %s139, 1
      %s141 = scalar_select %p138, %s139, %s140
      %p144 = pneg %p138
      %p145 = scmp.eq.s32.totalorder %s19, 1
      %p146 = por %p144, %p145
      %p147 = scmp.ne.s32.totalorder %s139, %s142
      %p148 = scmp.eq.s32.totalorder %s19, 0
      %p149 = por %p147, %p148
      %p150 = scmp.ne.s32.totalorder %s139, %s142
      %p151 = scmp.eq.s32.totalorder %s24, 1
      %p152 = por %p150, %p151
      %p153 = scmp.ne.s32.totalorder %s142, %s143
      %p154 = scmp.eq.s32.totalorder %s24, 0
      %p155 = por %p153, %p154
      %p156 = scmp.ne.s32.totalorder %s142, %s143
      %p157 = scmp.eq.s32.totalorder %s25, 1
      %p158 = por %p156, %p157
      %p160 = scmp.ne.s32.totalorder %s143, %s159
      %p161 = scmp.eq.s32.totalorder %s25, 0
      %p162 = por %p160, %p161
      %p163 = scmp.le.s32.totalorder 1, %s19
      %p164 = scmp.lt.s32.totalorder %s19, 3
      %p165 = pnand %p163, %p164
      %p166 = pneg %p165
      // Predicated region
      $region9: #{tpu_custom_call.1} parent=5 // pred_check
        _
      $region10: #{tpu_custom_call.1} parent=5 // pred_check_branch
        %168 = sbr.rel (%p165) target = $region12
      $region11: #{tpu_custom_call.1} parent=5 // pred_region
        %s169 = ssub.s32 %s19, 1
        // Predicated region
        $region13: #{tpu_custom_call.1} parent=11 // pred_check
          %p170 = pneg %p66
        $region14: #{tpu_custom_call.1} parent=11 // pred_check_branch
          %172 = sbr.rel (%p170) target = $region16
        $region15: #{tpu_custom_call.1} parent=11 // pred_region
          %174 = vsyncadd [#allocation6], 0
          %s175 = sshll.u32 %s1, 4
          %s176 = int_to_ptr.hbm [resolvable:$true] %s175
          %s177 = sshll.u32 [#allocation5], 4
          %s178 = int_to_ptr.vmem [resolvable:$true] %s177
          %183 = dma.hbm_to_vmem [thread:$0]  %s176, 128, %s178, [#allocation6], 64, 64, 4
        $region16: #{tpu_custom_call.1} parent=11 // pred_fallthru
          _
        // Predicated region
        $region17: #{tpu_custom_call.1} parent=11 // pred_check
          %p184 = pneg %p87
        $region18: #{tpu_custom_call.1} parent=11 // pred_check_branch
          %186 = sbr.rel (%p184) target = $region20
        $region19: #{tpu_custom_call.1} parent=11 // pred_region
          %188 = vsyncadd [#allocation6], 0
          %s189 = sshll.u32 %s2, 4
          %s190 = int_to_ptr.hbm [resolvable:$true] %s189
          %s191 = sshll.u32 [#allocation7], 4
          %s192 = int_to_ptr.vmem [resolvable:$true] %s191
          %197 = dma.hbm_to_vmem [thread:$0]  %s190, 256, %s192, [#allocation6], 64, 64, 4
        $region20: #{tpu_custom_call.1} parent=11 // pred_fallthru
          _
        // Predicated region
        $region21: #{tpu_custom_call.1} parent=11 // pred_check
          %p198 = pneg %p108
        $region22: #{tpu_custom_call.1} parent=11 // pred_check_branch
          %200 = sbr.rel (%p198) target = $region24
        $region23: #{tpu_custom_call.1} parent=11 // pred_region
          %202 = vsyncadd [#allocation9], 0
          %s203 = sshll.u32 %s3, 4
          %s204 = int_to_ptr.hbm [resolvable:$true] %s203
          %s205 = sshll.u32 [#allocation8], 4
          %s206 = int_to_ptr.vmem [resolvable:$true] %s205
          %211 = dma.hbm_to_vmem [thread:$0]  %s204, 256, %s206, [#allocation9], 64, 64, 4
        $region24: #{tpu_custom_call.1} parent=11 // pred_fallthru
          _
        // Predicated region
        $region25: #{tpu_custom_call.1} parent=11 // pred_check
          %p212 = pneg %p129
        $region26: #{tpu_custom_call.1} parent=11 // pred_check_branch
          %214 = sbr.rel (%p212) target = $region28
        $region27: #{tpu_custom_call.1} parent=11 // pred_region
          %216 = vsyncadd [#allocation9], 0
          %s218 = sshll.u32 %s4, 4
          %s219 = int_to_ptr.hbm [resolvable:$true] %s218
          %s220 = sshll.u32 [#allocation10], 4
          %s221 = int_to_ptr.vmem [resolvable:$true] %s220
          %223 = dma.hbm_to_vmem [thread:$0]  %s219, 128, %s221, [#allocation9]
        $region28: #{tpu_custom_call.1} parent=11 // pred_fallthru
          _
      $region12: #{tpu_custom_call.1} parent=5 // pred_fallthru
        _
      %p224 = scmp.lt.s32.totalorder %s19, 2
      // Predicated region
      $region29: #{tpu_custom_call.1} parent=5 // pred_check
        %p225 = pneg %p224
      $region30: #{tpu_custom_call.1} parent=5 // pred_check_branch
        %227 = sbr.rel (%p225) target = $region32
      $region31: #{tpu_custom_call.1} parent=5 // pred_region
        // Predicated region
        $region33: #{tpu_custom_call.1} parent=31 // pred_check
          %p228 = pneg %p39
        $region34: #{tpu_custom_call.1} parent=31 // pred_check_branch
          %230 = sbr.rel (%p228) target = $region36
        $region35: #{tpu_custom_call.1} parent=31 // pred_region
          %s231 = sand.u32 %s29, 1
          %s232 = scalar_lea.sflag [#allocation3], %s231
          %s233 = sand.u32 %s29, 1
          %s234 = smul.addr %s233, 8
          %s235 = scalar_lea.vmem [#allocation2], %s234
          %237 = vsyncadd %s232, 0
          %s238 = smul.addr %s19, 8
          %s239 = scalar_lea.hbm %s0, %s238
          %s241 = sshll.u32 %s239, 4
          %s242 = int_to_ptr.hbm [resolvable:$true] %s241
          %s243 = sshll.u32 %s235, 4
          %s244 = int_to_ptr.vmem [resolvable:$true] %s243
          %246 = dma.hbm_to_vmem [thread:$0]  %s242, 128, %s244, %s232
        $region36: #{tpu_custom_call.1} parent=31 // pred_fallthru
          _
      $region32: #{tpu_custom_call.1} parent=5 // pred_fallthru
        _
      %p247 = scmp.le.s32.totalorder 1, %s19
      %p248 = scmp.lt.s32.totalorder %s19, 3
      %p249 = pnand %p247, %p248
      %p250 = pneg %p249
      // Predicated region
      $region37: #{tpu_custom_call.1} parent=5 // pred_check
        _
      $region38: #{tpu_custom_call.1} parent=5 // pred_check_branch
        %252 = sbr.rel (%p249) target = $region40
      $region39: #{tpu_custom_call.1} parent=5 // pred_region
        %s253 = ssub.s32 %s19, 1
        %s254 = sand.u32 %s32, 1
        %s255 = scalar_lea.sflag [#allocation3], %s254
        %s256 = sand.u32 %s32, 1
        %s257 = smul.addr %s256, 8
        %s258 = scalar_lea.vmem [#allocation2], %s257
        // Predicated region
        $region41: #{tpu_custom_call.1} parent=39 // pred_check
          %p259 = pneg %p45
        $region42: #{tpu_custom_call.1} parent=39 // pred_check_branch
          %261 = sbr.rel (%p259) target = $region44
        $region43: #{tpu_custom_call.1} parent=39 // pred_region
          %263 = dma.done %s255, 128
        $region44: #{tpu_custom_call.1} parent=39 // pred_fallthru
          _
        // Predicated region
        $region45: #{tpu_custom_call.1} parent=39 // pred_check
          %p264 = pneg %p66
        $region46: #{tpu_custom_call.1} parent=39 // pred_check_branch
          %266 = sbr.rel (%p264) target = $region48
        $region47: #{tpu_custom_call.1} parent=39 // pred_region
          %268 = dma.done [#allocation6], 128
        $region48: #{tpu_custom_call.1} parent=39 // pred_fallthru
          _
        // Predicated region
        $region49: #{tpu_custom_call.1} parent=39 // pred_check
          %p269 = pneg %p87
        $region50: #{tpu_custom_call.1} parent=39 // pred_check_branch
          %271 = sbr.rel (%p269) target = $region52
        $region51: #{tpu_custom_call.1} parent=39 // pred_region
          %273 = dma.done [#allocation6], 256
        $region52: #{tpu_custom_call.1} parent=39 // pred_fallthru
          _
        // Predicated region
        $region53: #{tpu_custom_call.1} parent=39 // pred_check
          %p274 = pneg %p108
        $region54: #{tpu_custom_call.1} parent=39 // pred_check_branch
          %276 = sbr.rel (%p274) target = $region56
        $region55: #{tpu_custom_call.1} parent=39 // pred_region
          %278 = dma.done [#allocation9], 256
        $region56: #{tpu_custom_call.1} parent=39 // pred_fallthru
          _
        // Predicated region
        $region57: #{tpu_custom_call.1} parent=39 // pred_check
          %p279 = pneg %p129
        $region58: #{tpu_custom_call.1} parent=39 // pred_check_branch
          %281 = sbr.rel (%p279) target = $region60
        $region59: #{tpu_custom_call.1} parent=39 // pred_region
          %283 = dma.done [#allocation9], 128
        $region60: #{tpu_custom_call.1} parent=39 // pred_fallthru
          _
        %s284 = sand.u32 %s32, 1
        %s285 = scalar_lea.sflag [#allocation3], %s284
        %s286 = sand.u32 %s32, 1
        %s287 = smul.addr %s286, 8
        %s288 = scalar_lea.vmem [#allocation2], %s287
        %p289 = pneg %p45
        %p290 = pneg %p42
        %p291 = pneg %p66
        %p292 = pneg %p63
        %p293 = pneg %p87
        %p294 = pneg %p84
        %p295 = pneg %p108
        %p296 = pneg %p105
        %p297 = pneg %p129
        %p298 = pneg %p126
        %p299 = pneg %p155
        %p300 = pneg %p152
        %s301 = sand.u32 %s142, 1
        %s302 = scalar_lea.sflag [#allocation4], %s301
        %s303 = sand.u32 %s142, 1
        %s304 = smul.addr %s303, 8
        %s305 = scalar_lea.vmem [#allocation11], %s304
        %v307 = vld [vmem:[%s258] sm:$0xff]
        %v308 = vpack.c.bf16 %v307, %v307
        %v309 = vld [vmem:[#allocation5] sm:$0xf]
        %v310 = vld [vmem:[#allocation5 + $0x4] sm:$0xf]
        %v311 = vld [vmem:[#allocation10] sm:$0x1]
        %v312 = vperm.slane %v311, 0
        %v315 = vunpack.c.l.b16 %v309
        %v316 = vunpack.c.l.b16 %v310
        %v317 = vpack.c.b16 %v316, %v315
        %vm319 = vcmask 130048
        %v321 = vsel %vm319, %v308, 0
        %323 = vmatpush.bf16.msra.mxu0 0
        %324 = vmatpush.bf16.msra.mxu0 0
        %325 = vmatpush.bf16.msra.mxu0 0
        %326 = vmatpush.bf16.msra.mxu0 0
        %327 = vmatpush.bf16.msra.mxu0 0
        %328 = vmatpush.bf16.msra.mxu0 0
        %329 = vmatpush.bf16.msra.mxu0 0
        %330 = vmatpush.bf16.msra.mxu0 %v317
        %331 = vmatmul.bf16.gmra.mxu0 %v321
        %v332 = vpop.f32.mrf.mxu0
        %v333 = vadd.f32 %v312, %v332
        %v334 = vpop.f32.mrf.mxu0
        %335 = vdwg.mxu0
        %v336 = vld [vmem:[#allocation10 + $0x1] sm:$0x1]
        %v337 = vld [vmem:[#allocation10 + $0x2] sm:$0x1]
        %vm338 = vcmask 261120
        %v339 = vsel %vm338, %v333, 0.0
        %340 = vadd.xlane.f32.xlu0 %v339
        %v341 = vpop.xlane.xlu0 %340
        %v342 = vmul.f32 %v341, 0.03125
        %v343 = vmul.f32 %v333, %v333
        %v344 = vsel %vm338, %v343, 0.0
        %345 = vadd.xlane.f32.xlu0 %v344
        %v346 = vpop.xlane.xlu0 %345
        %v347 = vmul.f32 %v346, 0.03125
        %v348 = vmul.f32 %v342, %v342
        %v349 = vsub.f32 %v347, %v348
        %v350 = vmax.f32 %v349, 0.0
        %v351 = vsub.f32 %v333, %v342
        %v352 = vadd.f32 %v350, 1e-05
        %v353 = vrsqrt.pop %v352
        %v354 = vmul.f32 %v353, %v352
        %v355 = vmul.f32 %v354, %v353
        %v356 = vmul.f32 0.5, %v355
        %v357 = vsub.f32 1.5, %v356
        %v358 = vmul.f32 %v353, %v357
        %vm359 = vweird.f32 %v352
        %vm360 = vweird.f32 %v353
        %vm361 = vmor %vm359, %vm360
        %v362 = vsel %vm361, %v353, %v358
        %v363 = vmul.f32 %v351, %v362
        %v364 = vperm.slane %v336, 0
        %v365 = vmul.f32 %v363, %v364
        %v366 = vperm.slane %v337, 0
        %v367 = vadd.f32 %v365, %v366
        %v368 = vmax.f32 %v367, 0.0
        %v369 = vpack.c.bf16 %v368, %v368
        %v370 = vld [vmem:[#allocation7] sm:$0xf]
        %v371 = vld [vmem:[#allocation7 + $0x4] sm:$0xf]
        %v372 = vld [vmem:[#allocation7 + $0x8] sm:$0xf]
        %v373 = vld [vmem:[#allocation7 + $0xc] sm:$0xf]
        %v374 = vld [vmem:[#allocation10 + $0x3] sm:$0x1]
        %v375 = vperm.slane %v374, 0
        %v380 = vunpack.c.l.b16 %v370
        %v381 = vunpack.c.l.b16 %v371
        %v382 = vunpack.c.l.b16 %v372
        %v383 = vunpack.c.l.b16 %v373
        %v384 = vpack.c.b16 %v381, %v380
        %v385 = vpack.c.b16 %v383, %v382
        %v389 = vsel %vm338, %v369, 0
        %391 = vmatpush.bf16.msra.mxu0 0
        %392 = vmatpush.bf16.msra.mxu0 0
        %393 = vmatpush.bf16.msra.mxu0 0
        %394 = vmatpush.bf16.msra.mxu0 0
        %395 = vmatpush.bf16.msra.mxu0 0
        %396 = vmatpush.bf16.msra.mxu0 0
        %397 = vmatpush.bf16.msra.mxu0 %v385
        %398 = vmatpush.bf16.msra.mxu0 %v384
        %399 = vmatmul.bf16.gmra.mxu0 %v389
        %v400 = vpop.f32.mrf.mxu0
        %v401 = vadd.f32 %v375, %v400
        %v402 = vpop.f32.mrf.mxu0
        %403 = vdwg.mxu0
        %v404 = vld [vmem:[#allocation10 + $0x4] sm:$0x1]
        %v405 = vld [vmem:[#allocation10 + $0x5] sm:$0x1]
        %v406 = vsel %vm338, %v401, 0.0
        %407 = vadd.xlane.f32.xlu0 %v406
        %v408 = vpop.xlane.xlu0 %407
        %v409 = vmul.f32 %v408, 0.03125
        %v410 = vmul.f32 %v401, %v401
        %v411 = vsel %vm338, %v410, 0.0
        %412 = vadd.xlane.f32.xlu0 %v411
        %v413 = vpop.xlane.xlu0 %412
        %v414 = vmul.f32 %v413, 0.03125
        %v415 = vmul.f32 %v409, %v409
        %v416 = vsub.f32 %v414, %v415
        %v417 = vmax.f32 %v416, 0.0
        %v418 = vsub.f32 %v401, %v409
        %v419 = vadd.f32 %v417, 1e-05
        %v420 = vrsqrt.pop %v419
        %v421 = vmul.f32 %v420, %v419
        %v422 = vmul.f32 %v421, %v420
        %v423 = vmul.f32 0.5, %v422
        %v424 = vsub.f32 1.5, %v423
        %v425 = vmul.f32 %v420, %v424
        %vm426 = vweird.f32 %v419
        %vm427 = vweird.f32 %v420
        %vm428 = vmor %vm426, %vm427
        %v429 = vsel %vm428, %v420, %v425
        %v430 = vmul.f32 %v418, %v429
        %v431 = vperm.slane %v404, 0
        %v432 = vmul.f32 %v430, %v431
        %v433 = vperm.slane %v405, 0
        %v434 = vadd.f32 %v432, %v433
        %v435 = vmax.f32 %v434, 0.0
        %v436 = vpack.c.bf16 %v435, %v435
        %v437 = vld [vmem:[#allocation8] sm:$0xf]
        %v438 = vld [vmem:[#allocation8 + $0x4] sm:$0xf]
        %v439 = vld [vmem:[#allocation8 + $0x8] sm:$0xf]
        %v440 = vld [vmem:[#allocation8 + $0xc] sm:$0xf]
        %v441 = vld [vmem:[#allocation10 + $0x6] sm:$0x1]
        %v442 = vperm.slane %v441, 0
        %v447 = vunpack.c.l.b16 %v437
        %v448 = vunpack.c.l.b16 %v438
        %v449 = vunpack.c.l.b16 %v439
        %v450 = vunpack.c.l.b16 %v440
        %v451 = vpack.c.b16 %v448, %v447
        %v452 = vpack.c.b16 %v450, %v449
        %v456 = vsel %vm338, %v436, 0
        %458 = vmatpush.bf16.msra.mxu0 0
        %459 = vmatpush.bf16.msra.mxu0 0
        %460 = vmatpush.bf16.msra.mxu0 0
        %461 = vmatpush.bf16.msra.mxu0 0
        %462 = vmatpush.bf16.msra.mxu0 0
        %463 = vmatpush.bf16.msra.mxu0 0
        %464 = vmatpush.bf16.msra.mxu0 %v452
        %465 = vmatpush.bf16.msra.mxu0 %v451
        %466 = vmatmul.bf16.gmra.mxu0 %v456
        %v467 = vpop.f32.mrf.mxu0
        %v468 = vadd.f32 %v442, %v467
        %v469 = vpop.f32.mrf.mxu0
        %470 = vdwg.mxu0
        %471 = vst [vmem:[%s305] sm:$0xff] %v468
        %s472 = sand.u32 %s142, 1
        %s473 = scalar_lea.sflag [#allocation4], %s472
        %s474 = sand.u32 %s142, 1
        %s475 = smul.addr %s474, 8
        %s476 = scalar_lea.vmem [#allocation11], %s475
        // Predicated region
        $region61: #{tpu_custom_call.1} parent=39 // pred_check
          %p477 = pneg %p152
        $region62: #{tpu_custom_call.1} parent=39 // pred_check_branch
          %479 = sbr.rel (%p477) target = $region64
        $region63: #{tpu_custom_call.1} parent=39 // pred_region
          %481 = vsyncadd %s473, 0
          %s482 = smul.addr %s24, 8
          %s483 = scalar_lea.hbm %s5, %s482
          %s485 = sshll.u32 %s476, 4
          %s486 = int_to_ptr.vmem [resolvable:$true] %s485
          %s487 = sshll.u32 %s483, 4
          %s488 = int_to_ptr.hbm [resolvable:$true] %s487
          %490 = dma.vmem_to_hbm [thread:$0]  %s486, 128, %s488, %s473
        $region64: #{tpu_custom_call.1} parent=39 // pred_fallthru
          _
      $region40: #{tpu_custom_call.1} parent=5 // pred_fallthru
        _
      %p491 = scmp.le.s32.totalorder 2, %s19
      // Predicated region
      $region65: #{tpu_custom_call.1} parent=5 // pred_check
        %p492 = pneg %p491
      $region66: #{tpu_custom_call.1} parent=5 // pred_check_branch
        %494 = sbr.rel (%p492) target = $region68
      $region67: #{tpu_custom_call.1} parent=5 // pred_region
        %s495 = ssub.s32 %s19, 2
        // Predicated region
        $region69: #{tpu_custom_call.1} parent=67 // pred_check
          %p496 = pneg %p158
        $region70: #{tpu_custom_call.1} parent=67 // pred_check_branch
          %498 = sbr.rel (%p496) target = $region72
        $region71: #{tpu_custom_call.1} parent=67 // pred_region
          %s499 = sand.u32 %s143, 1
          %s500 = scalar_lea.sflag [#allocation4], %s499
          %s501 = sand.u32 %s143, 1
          %s502 = smul.addr %s501, 8
          %s503 = scalar_lea.vmem [#allocation11], %s502
          %505 = dma.done %s500, 128
        $region72: #{tpu_custom_call.1} parent=67 // pred_fallthru
          _
      $region68: #{tpu_custom_call.1} parent=5 // pred_fallthru
        _
    $region6: #{tpu_custom_call.1} parent=1 // loop_footer
      %s23 = sadd.s32 1, %s19
    $region7: #{tpu_custom_call.1} parent=1 // loop_footer_branch
      %18 = sbr.rel target = $region3
    $region8: #{tpu_custom_call.1} parent=1 // loop_exit
      _
    %506 = vsyncpa [#allocation3], 1
    %s507 = scalar_lea.sflag [#allocation3], 1
    %508 = vsyncpa %s507, 1
    %509 = vsyncpa [#allocation6], 1
    %510 = vsyncpa [#allocation9], 1
    %511 = vsyncpa [#allocation4], 1
    %s512 = scalar_lea.sflag [#allocation4], 1
    %513 = vsyncpa %s512, 1

</llo_original>
